<compile_context>
chip_gen: v6e
topology: v6e:2x2x1
jax: 0.10.0
libtpu: 0.0.40
codegen_flags: <defaults>
</compile_context>

<pallas_src>
import jax
import jax.numpy as jnp
from jax import lax
from jax.experimental import pallas as pl
from jax.experimental.pallas import tpu as pltpu

EPS = 1e-5          # nn.BatchNorm2d default
NUM_TASKS = 3       # stands in for args.num_tasks

# VMEM budget for the 2x double-buffered (in + out) channel tiles.  16 MiB is
# safe under every generation's scoped limit once we also raise the limit to
# 32 MiB (>= defaults on v6e/v7x, lifts v5e's 16 MiB default) and leaves
# headroom for in-kernel temporaries.
_PIPELINE_TILE_BUDGET = 16 * 1024 * 1024
_VMEM_LIMIT_BYTES = 32 * 1024 * 1024


def _bn_kernel(x_ref, o_ref):
    # x_ref: (N, Ct, HW).  Per-channel stats over axes (0, 2).
    x = x_ref[...].astype(jnp.float32)
    n_elems = x.shape[0] * x.shape[2]

    # Fold the N axis first with elementwise VALU adds, then a single
    # cross-lane (XLU) reduction per channel row.
    s_row = jnp.sum(x, axis=0)            # (Ct, HW)
    ss_row = jnp.sum(x * x, axis=0)       # (Ct, HW)
    sum_x = jnp.sum(s_row, axis=-1, keepdims=True)     # (Ct, 1)
    sum_xx = jnp.sum(ss_row, axis=-1, keepdims=True)   # (Ct, 1)

    mean = sum_x / n_elems
    var = jnp.maximum(sum_xx / n_elems - mean * mean, 0.0)
    inv_std = lax.rsqrt(var + EPS)

    # Broadcast (Ct, 1) stats over (N, Ct, HW) and normalize at the store.
    o_ref[...] = ((x - mean[None]) * inv_std[None]).astype(o_ref.dtype)


def _pick_channel_tile(N, C, HW, itemsize):
    """Largest channel tile whose double-buffered in+out tiles fit the budget."""
    per_channel = 4 * N * HW * itemsize          # 2 bufs x (in + out)
    ct = max(1, _PIPELINE_TILE_BUDGET // per_channel)
    if ct >= C:
        return C
    # Keep the sublane (second-to-last) block dim a multiple of 8 when tiling.
    ct = max(8, (ct // 8) * 8)
    return min(ct, C)


@jax.jit
def _bn_forward(x):
    N, C, H, W = x.shape
    HW = H * W
    itemsize = jnp.dtype(x.dtype).itemsize

    # Free reshape: NCHW -> (N, C, H*W); no HBM transpose.
    x3 = x.reshape(N, C, HW)

    ct = _pick_channel_tile(N, C, HW, itemsize)
    grid = (pl.cdiv(C, ct),)

    block_spec = pl.BlockSpec((N, ct, HW), lambda i: (0, i, 0))

    cost = pl.CostEstimate(
        flops=5 * N * C * HW,
        transcendentals=C,
        bytes_accessed=2 * N * C * HW * itemsize,
    )

    out3 = pl.pallas_call(
        _bn_kernel,
        out_shape=jax.ShapeDtypeStruct((N, C, HW), x.dtype),
        grid_spec=pltpu.PrefetchScalarGridSpec(
            num_scalar_prefetch=0,
            grid=grid,
            in_specs=[block_spec],
            out_specs=pl.BlockSpec((N, ct, HW), lambda i: (0, i, 0)),
        ),
        compiler_params=pltpu.CompilerParams(
            dimension_semantics=("parallel",),
            vmem_limit_bytes=_VMEM_LIMIT_BYTES,
        ),
        cost_estimate=cost,
    )(x3)

    return out3.reshape(N, C, H, W)


def multitask_nonaffine_bn(x, task_id):
    """Forward of MultitaskNonAffineBN: self.bns[task_id](x), training mode."""
    if not (0 <= task_id < NUM_TASKS):
        raise ValueError("task_id out of range")
    # Training-mode output is identical for every task; no per-task recompile.
    return _bn_forward(x)


def _reference_bn(x):
    mean = jnp.mean(x, axis=(0, 2, 3), keepdims=True)
    var = jnp.mean((x - mean) ** 2, axis=(0, 2, 3), keepdims=True)
    return (x - mean) / jnp.sqrt(var + EPS)


if __name__ == "__main__":
    key = jax.random.PRNGKey(0)
    # Small NCHW input consistent with the module: batch=2, channels=4, 16x16.
    x = jax.random.normal(key, (2, 4, 16, 16), dtype=jnp.float32)
    task_id = 1  # any task in [0, NUM_TASKS); output identical in training mode

    out = multitask_nonaffine_bn(x, task_id)
    out = jax.block_until_ready(out)

    ref = _reference_bn(x)
    assert out.shape == x.shape and out.dtype == x.dtype
    assert jnp.allclose(out, ref, atol=1e-5, rtol=1e-5), "mismatch vs reference"

    print("KERNEL_OK")
</pallas_src>

<mosaic_0001>
module attributes {stable_mosaic.version = 11 : i64} {
  func.func @_bn_kernel(%arg0: i32, %arg1: memref<2x4x256xf32, #tpu.memory_space<vmem>>, %arg2: memref<2x4x256xf32, #tpu.memory_space<vmem>>) attributes {dimension_semantics = [#tpu.dimension_semantics<parallel>], iteration_bounds = array<i64: 1>, scalar_prefetch = 0 : i64, scratch_operands = 0 : i64, tpu.core_type = #tpu.core_type<tc>, window_params = [{transform_indices = @transform_0, window_bounds = array<i64: 2, 4, 256>}, {transform_indices = @transform_1, window_bounds = array<i64: 2, 4, 256>}]} {
    %c0 = arith.constant 0 : index
    %c0_0 = arith.constant 0 : index
    %c0_1 = arith.constant 0 : index
    %0 = vector.load %arg1[%c0, %c0_0, %c0_1] : memref<2x4x256xf32, #tpu.memory_space<vmem>>, vector<2x4x256xf32>
    %cst = arith.constant dense<0.000000e+00> : vector<4x256xf32>
    %1 = vector.multi_reduction <add>, %0, %cst [0] : vector<2x4x256xf32> to vector<4x256xf32>
    %2 = arith.mulf %0, %0 : vector<2x4x256xf32>
    %cst_2 = arith.constant dense<0.000000e+00> : vector<4x256xf32>
    %3 = vector.multi_reduction <add>, %2, %cst_2 [0] : vector<2x4x256xf32> to vector<4x256xf32>
    %cst_3 = arith.constant dense<0.000000e+00> : vector<4xf32>
    %4 = vector.multi_reduction <add>, %1, %cst_3 [1] : vector<4x256xf32> to vector<4xf32>
    %5 = vector.shape_cast %4 : vector<4xf32> to vector<4x1xf32>
    %cst_4 = arith.constant dense<0.000000e+00> : vector<4xf32>
    %6 = vector.multi_reduction <add>, %3, %cst_4 [1] : vector<4x256xf32> to vector<4xf32>
    %7 = vector.shape_cast %6 : vector<4xf32> to vector<4x1xf32>
    %cst_5 = arith.constant 5.120000e+02 : f32
    %8 = vector.broadcast %cst_5 : f32 to vector<4x1xf32>
    %9 = arith.divf %5, %8 : vector<4x1xf32>
    %cst_6 = arith.constant 5.120000e+02 : f32
    %10 = vector.broadcast %cst_6 : f32 to vector<4x1xf32>
    %11 = arith.divf %7, %10 : vector<4x1xf32>
    %12 = arith.mulf %9, %9 : vector<4x1xf32>
    %13 = arith.subf %11, %12 : vector<4x1xf32>
    %cst_7 = arith.constant 0.000000e+00 : f32
    %14 = vector.broadcast %cst_7 : f32 to vector<4x1xf32>
    %15 = arith.maximumf %13, %14 : vector<4x1xf32>
    %cst_8 = arith.constant 9.99999974E-6 : f32
    %16 = vector.broadcast %cst_8 : f32 to vector<4x1xf32>
    %17 = arith.addf %15, %16 : vector<4x1xf32>
    %18 = math.rsqrt %17 : vector<4x1xf32>
    %19 = vector.shape_cast %9 : vector<4x1xf32> to vector<1x4x1xf32>
    %20 = vector.broadcast %19 : vector<1x4x1xf32> to vector<2x4x256xf32>
    %21 = arith.subf %0, %20 : vector<2x4x256xf32>
    %22 = vector.shape_cast %18 : vector<4x1xf32> to vector<1x4x1xf32>
    %23 = vector.broadcast %22 : vector<1x4x1xf32> to vector<2x4x256xf32>
    %24 = arith.mulf %21, %23 : vector<2x4x256xf32>
    %c0_9 = arith.constant 0 : index
    %c0_10 = arith.constant 0 : index
    %c0_11 = arith.constant 0 : index
    %25 = vector.load %arg2[%c0_9, %c0_10, %c0_11] : memref<2x4x256xf32, #tpu.memory_space<vmem>>, vector<2x4x256xf32>
    tpu.vector_store %arg2[%c0_9, %c0_10, %c0_11], %24 {strides = array<i32>} : memref<2x4x256xf32, #tpu.memory_space<vmem>>, vector<2x4x256xf32>,
    return
  }
  func.func @transform_0(%arg0: i32) -> (i32, i32, i32) {
    %c0_i32 = arith.constant 0 : i32
    %c0_i32_0 = arith.constant 0 : i32
    %c0_i32_1 = arith.constant 0 : i32
    return %c0_i32, %arg0, %c0_i32_0 : i32, i32, i32
  }
  func.func @transform_1(%arg0: i32) -> (i32, i32, i32) {
    %c0_i32 = arith.constant 0 : i32
    %c0_i32_0 = arith.constant 0 : i32
    %c0_i32_1 = arith.constant 0 : i32
    return %c0_i32, %arg0, %c0_i32_0 : i32, i32, i32
  }
}

</mosaic_0001>

<llo_original>
// kernel: _bn_forward.1
$region0: #{_bn_forward.1}
  #allocation0 [shape = 'u32[]', space=smem, size = 0x4, offset = 0x4, fixed_abs, tag = 'smem constant byte address 0x4 - core index']
  #allocation1 [shape = 'u32[144,128]{1,0:T(1,128)}', space=vmem, size = 0x12000, scoped, tag = 'internal scratch']
  %s0 = inlined_call_operand.vmem [shape: f32[2,4,256], index: 0, kind: input, shape index: {}]
  %s1 = inlined_call_operand.vmem [shape: f32[2,4,256], index: 1, kind: output, shape index: {}]
  %s2 = sld [smem:[#allocation0]]
  $region14: #{_bn_forward.1} parent=0
    _
  %s4 = ssub.s32 1, %s2
  %s5 = scalar_select 0, %s4, %s2
  // Predicated region
  $region2: #{_bn_forward.1} parent=0 // pred_check
    _
  $region3: #{_bn_forward.1} parent=0 // pred_check_branch
    %7 = sbr.rel (0) target = $region5
  $region4: #{_bn_forward.1} parent=0 // pred_region
    _
  $region5: #{_bn_forward.1} parent=0 // pred_fallthru
    _
  %v8 = vld [vmem:[%s0] sm:$0xff]
  %v9 = vld [vmem:[%s0 + $0x8] sm:$0xff]
  %v12 = vcombine.high %v8, %v8
  %v13 = vcombine.high %v9, %v9
  %vm16 = vcmask 1043456
  %v17 = vsel %vm16, %v8, 0.0
  %v18 = vsel %vm16, %v9, 0.0
  %v19 = vadd.f32 %v17, %v18
  %v20 = vsel %vm16, %v12, 0.0
  %v21 = vsel %vm16, %v13, 0.0
  %v22 = vadd.f32 %v20, %v21
  %v23 = vmul.f32 %v8, %v8
  %v24 = vmul.f32 %v9, %v9
  %v27 = vcombine.high %v23, %v23
  %v28 = vcombine.high %v24, %v24
  %v31 = vsel %vm16, %v23, 0.0
  %v32 = vsel %vm16, %v24, 0.0
  %v33 = vadd.f32 %v31, %v32
  %v34 = vsel %vm16, %v27, 0.0
  %v35 = vsel %vm16, %v28, 0.0
  %v36 = vadd.f32 %v34, %v35
  %v37 = vsel %vm16, %v19, 0.0
  %v38 = vsel %vm16, %v22, 0.0
  %v39 = vadd.f32 %v37, %v38
  %40 = vadd.xlane.f32.xlu0 %v39
  %v41 = vpop.xlane.xlu0 %40
  %v42 = vsel %vm16, %v33, 0.0
  %v43 = vsel %vm16, %v36, 0.0
  %v44 = vadd.f32 %v42, %v43
  %45 = vadd.xlane.f32.xlu0 %v44
  %v46 = vpop.xlane.xlu0 %45
  %v47 = vrcp.pop 512.0
  %v48 = vmul.f32 %v41, %v47
  %v49 = vmul.f32 %v46, %v47
  %v50 = vmul.f32 %v48, %v48
  %v51 = vsub.f32 %v49, %v50
  %v52 = vmax.f32 %v51, 0.0
  %v53 = vadd.f32 %v52, 1e-05
  %v54 = vrsqrt.pop %v53
  %v57 = vunpack.c.l.s4 839922192
  %v58 = vunpack.c.0.s8 %v57
  %v59 = vlaneseq
  %v60 = vshrl.u32 %v59, 7
  %v61 = vsub.s32 %v58, %v60
  %v62 = vrot.slane %v48, %v61
  %v64 = vsub.f32 %v8, %v62
  %v65 = vsub.f32 %v9, %v62
  %v68 = vunpack.c.l.s4 839922192
  %v69 = vunpack.c.0.s8 %v68
  %v70 = vlaneseq
  %v71 = vshrl.u32 %v70, 7
  %v72 = vsub.s32 %v69, %v71
  %v73 = vrot.slane %v54, %v72
  %v75 = vmul.f32 %v64, %v73
  %v76 = vmul.f32 %v65, %v73
  %77 = vst [vmem:[%s1] sm:$0xff] %v75
  %78 = vst [vmem:[%s1 + $0x8] sm:$0xff] %v76
  // Predicated region
  $region6: #{_bn_forward.1} parent=0 // pred_check
    _
  $region7: #{_bn_forward.1} parent=0 // pred_check_branch
    %80 = sbr.rel (0) target = $region9
  $region8: #{_bn_forward.1} parent=0 // pred_region
    _
  $region9: #{_bn_forward.1} parent=0 // pred_fallthru
    _
  // Predicated region
  $region10: #{_bn_forward.1} parent=0 // pred_check
    _
  $region11: #{_bn_forward.1} parent=0 // pred_check_branch
    %82 = sbr.rel (0) target = $region13
  $region12: #{_bn_forward.1} parent=0 // pred_region
    _
  $region13: #{_bn_forward.1} parent=0 // pred_fallthru
    _

</llo_original>
